<compile_context>
chip_gen: v6e
topology: v6e:2x2x1
jax: 0.10.0
libtpu: 0.0.40
codegen_flags: <defaults>
</compile_context>

<pallas_src>
import math

import jax
import jax.numpy as jnp
from jax.experimental import pallas as pl
from jax.experimental.pallas import tpu as pltpu

LANE = 128


def _round_up(x, m):
    return ((x + m - 1) // m) * m


def _cdiv(a, b):
    return (a + b - 1) // b


def _sublane(itemsize):
    # Packed sublane tile: 8 rows for 4-byte, 16 for 2-byte, 32 for 1-byte.
    return max(8, 32 // int(itemsize))


def _vmem_budget_and_limit():
    """Generation-aware (planning budget, scoped-VMEM limit) in bytes."""
    cap = None
    try:
        cap = int(pltpu.get_tpu_info().vmem_capacity_bytes)
    except Exception:
        cap = None
    if cap is None or cap <= 80 * 1024 * 1024:
        # v7x (64 MiB VMEM per TensorCore) or unknown -> conservative.
        return 36 * 1024 * 1024, 48 * 1024 * 1024
    # v5e / v6e: 128 MiB VMEM.
    return 64 * 1024 * 1024, 96 * 1024 * 1024


def _group_offsets(group_sizes):
    offs, off = [], 0
    for g in group_sizes:
        offs.append((off, int(g)))
        off += int(g)
    return tuple(offs)


# --------------------------------------------------------------------------
# Kernels
# --------------------------------------------------------------------------
def _make_resident_kernel(group_sizes, c_pad, a_pad):
    """Feature tile x full VMEM-resident centroid matrix.

    Single merged output block [Bt, c_pad + a_pad]: sims in columns
    [0, c_pad), per-task amax in columns [c_pad, c_pad + T).
    """
    offs = _group_offsets(group_sizes)

    def kernel(feat_ref, w_ref, out_ref):
        # Contract on the last dim of both operands (no transpose); f32 accum.
        d = jax.lax.dot_general(
            feat_ref[...], w_ref[...],
            dimension_numbers=(((1,), (1,)), ((), ())),
            preferred_element_type=jnp.float32,
        )                                                   # [Bt, c_pad] f32
        out_ref[:, :c_pad] = d.astype(out_ref.dtype)        # lane-aligned store

        # Per-task max via static contiguous slices (no masks).  Padded
        # centroid columns lie past every group and never participate.
        maxes = [jnp.max(d[:, o:o + g], axis=1, keepdims=True) for o, g in offs]
        if a_pad > len(offs):
            maxes.append(jnp.zeros((d.shape[0], a_pad - len(offs)), jnp.float32))
        out_ref[:, c_pad:] = jnp.concatenate(maxes, axis=1).astype(out_ref.dtype)

    return kernel


def _make_tiled_kernel(group_sizes, c_tile, a_pad):
    """Feature tile x centroid column tiles (C grid axis).

    Running per-task max kept in an f32 VMEM scratch: init on the first C
    step, flushed to the amax output on the last.
    """
    offs = _group_offsets(group_sizes)

    def kernel(feat_ref, w_ref, sims_ref, amax_ref, acc_ref):
        j = pl.program_id(1)

        @pl.when(j == 0)
        def _():
            acc_ref[...] = jnp.full(acc_ref.shape, -jnp.inf, jnp.float32)

        d = jax.lax.dot_general(
            feat_ref[...], w_ref[...],
            dimension_numbers=(((1,), (1,)), ((), ())),
            preferred_element_type=jnp.float32,
        )                                                   # [Bt, c_tile] f32
        sims_ref[...] = d.astype(sims_ref.dtype)

        # Group boundaries are not tile-aligned -> membership from the global
        # column index.  Columns past C_total (zero / OOB padding) fall
        # outside every group and are excluded from all maxes.
        col = j * c_tile + jax.lax.broadcasted_iota(jnp.int32, d.shape, 1)
        upd = []
        for o, g in offs:
            in_grp = (col >= o) & (col < o + g)
            upd.append(jnp.max(jnp.where(in_grp, d, -jnp.inf),
                               axis=1, keepdims=True))
        if a_pad > len(offs):
            upd.append(jnp.full((d.shape[0], a_pad - len(offs)), -jnp.inf,
                                jnp.float32))
        acc_ref[...] = jnp.maximum(acc_ref[...], jnp.concatenate(upd, axis=1))

        @pl.when(j == pl.num_programs(1) - 1)
        def _():
            amax_ref[...] = acc_ref[...].astype(amax_ref.dtype)

    return kernel


# --------------------------------------------------------------------------
# Tile choosers
# --------------------------------------------------------------------------
def _choose_b_tile_resident(D, c_pad, a_pad, itemsize, sublane, budget):
    w_bytes = c_pad * D * itemsize                      # single-buffered centroids
    per_row = (2 * D * itemsize                         # feature tile (2x buffered)
               + 2 * (c_pad + a_pad) * itemsize         # merged output (2x buffered)
               + 4 * c_pad)                             # f32 matmul result
    avail = budget - w_bytes
    if avail < per_row * sublane:
        return None                                     # centroids too big -> tile C
    bt = min(512, avail // per_row)
    return int(max(sublane, (bt // sublane) * sublane))


def _choose_tiles_tiled(D, c_pad, a_pad, itemsize, sublane, budget, c_tile):
    if c_tile is None:
        c_tile = min(c_pad, 512)
        while c_tile > LANE and 2 * c_tile * D * itemsize > budget // 2:
            c_tile //= 2
    c_tile = max(LANE, (min(int(c_tile), c_pad) // LANE) * LANE)
    fixed = 2 * c_tile * D * itemsize                   # centroid tile (2x buffered)
    per_row = (2 * D * itemsize                         # feature tile
               + 2 * c_tile * itemsize + 4 * c_tile     # sims tile + f32 result
               + 2 * a_pad * itemsize + 4 * a_pad)      # amax tile + f32 scratch
    avail = max(budget - fixed, per_row * sublane)
    bt = min(512, avail // per_row)
    return int(max(sublane, (bt // sublane) * sublane)), int(c_tile)


# --------------------------------------------------------------------------
# Wrappers
# --------------------------------------------------------------------------
def prepare_centroids(centroids_list):
    """Concatenate + lane-pad all task centroids.  Hoist this out of the
    per-forward path: it only changes when add_classes() runs."""
    group_sizes = tuple(int(m.shape[0]) for m in centroids_list)
    assert all(g > 0 for g in group_sizes), "empty centroid group not supported"
    c_total = sum(group_sizes)
    c_pad = _round_up(c_total, LANE)
    w = jnp.concatenate(list(centroids_list), axis=0)
    if c_pad > c_total:
        w = jnp.pad(w, ((0, c_pad - c_total), (0, 0)))
    return w, group_sizes


def differ_mcm_forward_prepared(feature, w_all, group_sizes, *,
                                b_tile=None, c_tile=None):
    """DifferMCM.forward with sim_fn = dot product, on prepared centroids.

    feature: [B, D]; w_all: [C_pad, D]; group_sizes: static per-task counts.
    Returns (sims [B, sum(group_sizes)], amax [B, num_tasks]).
    """
    B, D = feature.shape
    c_pad, d_w = w_all.shape
    assert d_w == D and c_pad % LANE == 0
    group_sizes = tuple(int(g) for g in group_sizes)
    c_total = sum(group_sizes)
    T = len(group_sizes)
    a_pad = _round_up(max(T, 1), LANE)

    out_dtype = feature.dtype
    itemsize = jnp.dtype(out_dtype).itemsize
    sublane = _sublane(itemsize)
    budget, vmem_limit = _vmem_budget_and_limit()

    auto_bt = b_tile is None
    use_tiled = c_tile is not None
    if auto_bt:
        if not use_tiled:
            b_tile = _choose_b_tile_resident(D, c_pad, a_pad, itemsize,
                                             sublane, budget)
            if b_tile is None:
                use_tiled = True
        if use_tiled:
            b_tile, c_tile = _choose_tiles_tiled(D, c_pad, a_pad, itemsize,
                                                 sublane, budget, c_tile)
    else:
        b_tile = max(sublane, (int(b_tile) // sublane) * sublane)
        if use_tiled:
            _, c_tile = _choose_tiles_tiled(D, c_pad, a_pad, itemsize,
                                            sublane, budget, c_tile)

    b_sub = _round_up(B, sublane)
    b_tile = min(b_tile, b_sub)
    # Give megacore (v7x: 2 TensorCores) at least two "parallel" steps.
    if auto_bt and b_tile >= b_sub and b_sub >= 2 * sublane:
        b_tile = _round_up(_cdiv(b_sub, 2), sublane)
    num_b = _cdiv(B, b_tile)      # ragged last tile handled by Pallas padding

    if not use_tiled:
        out_w = c_pad + a_pad
        kernel = _make_resident_kernel(group_sizes, c_pad, a_pad)
        out = pl.pallas_call(
            kernel,
            out_shape=jax.ShapeDtypeStruct((B, out_w), out_dtype),
            grid=(num_b,),
            in_specs=[
                pl.BlockSpec((b_tile, D), lambda i: (i, 0)),
                # Invariant operand: full centroid matrix copied to VMEM once
                # (single-buffered, no per-step DMA).
                pl.BlockSpec(memory_space=pltpu.MemorySpace.VMEM),
            ],
            out_specs=pl.BlockSpec((b_tile, out_w), lambda i: (i, 0)),
            compiler_params=pltpu.CompilerParams(
                dimension_semantics=("parallel",),
                vmem_limit_bytes=vmem_limit,
            ),
        )(feature, w_all)
        return out[:, :c_total], out[:, c_pad:c_pad + T]

    # ---- C-tiled path (large centroid matrices) ---------------------------
    num_c = _cdiv(c_pad, c_tile)
    kernel = _make_tiled_kernel(group_sizes, c_tile, a_pad)
    sims_p, amax_p = pl.pallas_call(
        kernel,
        out_shape=(
            jax.ShapeDtypeStruct((B, c_pad), out_dtype),
            jax.ShapeDtypeStruct((B, a_pad), out_dtype),
        ),
        grid=(num_b, num_c),
        in_specs=[
            pl.BlockSpec((b_tile, D), lambda i, j: (i, 0)),
            pl.BlockSpec((c_tile, D), lambda i, j: (j, 0)),
        ],
        out_specs=(
            pl.BlockSpec((b_tile, c_tile), lambda i, j: (i, j)),
            pl.BlockSpec((b_tile, a_pad), lambda i, j: (i, 0)),
        ),
        scratch_shapes=[pltpu.VMEM((b_tile, a_pad), jnp.float32)],
        compiler_params=pltpu.CompilerParams(
            dimension_semantics=("parallel", "arbitrary"),
            vmem_limit_bytes=vmem_limit,
        ),
    )(feature, w_all)
    return sims_p[:, :c_total], amax_p[:, :T]


def differ_mcm_forward(feature, centroids_list, **kwargs):
    """Convenience wrapper: prepares the centroids then runs the kernel."""
    w_all, group_sizes = prepare_centroids(centroids_list)
    return differ_mcm_forward_prepared(feature, w_all, group_sizes, **kwargs)


def _kaiming_normal_linear(key, shape):
    """torch.nn.init.kaiming_normal_(t, nonlinearity='linear'):
    gain = 1, fan_in = shape[1], std = gain / sqrt(fan_in)."""
    fan_in = shape[1]
    std = 1.0 / math.sqrt(fan_in)
    return std * jax.random.normal(key, shape, dtype=jnp.float32)


if __name__ == "__main__":
    HI = jax.lax.Precision.HIGHEST

    # ---- Test 1: tiny config, resident-centroid path ----------------------
    in_channel = 32
    expansion_factor = 1.5
    B = 8
    n_classes_per_task = [4, 8]
    centroids_task = [math.ceil(n * expansion_factor) for n in n_classes_per_task]  # [6, 12]

    key = jax.random.PRNGKey(0)
    k_feat, *k_params = jax.random.split(key, 1 + len(centroids_task))
    feature = jax.random.normal(k_feat, (B, in_channel), dtype=jnp.float32)
    centroids_list = [_kaiming_normal_linear(k, (c, in_channel))
                      for k, c in zip(k_params, centroids_task)]

    w_all, group_sizes = prepare_centroids(centroids_list)   # hoisted, done once
    sims, amax = differ_mcm_forward_prepared(feature, w_all, group_sizes)
    sims = jax.block_until_ready(sims)
    amax = jax.block_until_ready(amax)

    ref = [jnp.dot(feature, m.T, precision=HI) for m in centroids_list]
    ref_sims = jnp.concatenate(ref, axis=1)
    ref_amax = jnp.concatenate([r.max(axis=1, keepdims=True) for r in ref], axis=1)
    assert sims.shape == (B, sum(centroids_task))
    assert amax.shape == (B, len(centroids_task))
    assert jnp.allclose(sims, ref_sims, atol=1e-4, rtol=1e-4)
    assert jnp.allclose(amax, ref_amax, atol=1e-4, rtol=1e-4)

    # ---- Test 2: larger centroid count, forced C-tiled path ---------------
    B2 = 16
    groups2 = [70, 80]            # C_total=150 -> C_pad=256; group 2 crosses tiles
    k2, *k2p = jax.random.split(jax.random.PRNGKey(1), 1 + len(groups2))
    feat2 = jax.random.normal(k2, (B2, in_channel), dtype=jnp.float32)
    cents2 = [_kaiming_normal_linear(k, (c, in_channel))
              for k, c in zip(k2p, groups2)]

    sims2, amax2 = differ_mcm_forward(feat2, cents2, b_tile=8, c_tile=128)
    sims2 = jax.block_until_ready(sims2)
    amax2 = jax.block_until_ready(amax2)

    ref2 = [jnp.dot(feat2, m.T, precision=HI) for m in cents2]
    ref2_sims = jnp.concatenate(ref2, axis=1)
    ref2_amax = jnp.concatenate([r.max(axis=1, keepdims=True) for r in ref2], axis=1)
    assert sims2.shape == (B2, sum(groups2))
    assert amax2.shape == (B2, len(groups2))
    assert jnp.allclose(sims2, ref2_sims, atol=1e-4, rtol=1e-4)
    assert jnp.allclose(amax2, ref2_amax, atol=1e-4, rtol=1e-4)

    print("KERNEL_OK")
</pallas_src>

<mosaic_0001>
module attributes {stable_mosaic.version = 11 : i64} {
  func.func @kernel(%arg0: i32, %arg1: memref<8x32xf32, #tpu.memory_space<vmem>>, %arg2: memref<128x32xf32, #tpu.memory_space<vmem>>, %arg3: memref<8x256xf32, #tpu.memory_space<vmem>>) attributes {dimension_semantics = [#tpu.dimension_semantics<parallel>], iteration_bounds = array<i64: 1>, scalar_prefetch = 0 : i64, scratch_operands = 0 : i64, tpu.core_type = #tpu.core_type<tc>, window_params = [{transform_indices = @transform_0, window_bounds = array<i64: 8, 32>}, {pipeline_mode = #tpu.pipeline_mode<synchronous>, transform_indices = @transform_1, window_bounds = array<i64: 128, 32>}, {transform_indices = @transform_2, window_bounds = array<i64: 8, 256>}]} {
    %c0 = arith.constant 0 : index
    %c0_0 = arith.constant 0 : index
    %0 = vector.load %arg1[%c0, %c0_0] : memref<8x32xf32, #tpu.memory_space<vmem>>, vector<8x32xf32>
    %c0_1 = arith.constant 0 : index
    %c0_2 = arith.constant 0 : index
    %1 = vector.load %arg2[%c0_1, %c0_2] : memref<128x32xf32, #tpu.memory_space<vmem>>, vector<128x32xf32>
    %cst = arith.constant dense<0.000000e+00> : vector<8x128xf32>
    %2 = tpu.matmul %0, %1, %cst {dimension_numbers = #tpu.dot_dimension_numbers<[1], [1], [0], [0], [0, 0, 1, 0], [], []>} : vector<8x32xf32>, vector<128x32xf32>, vector<8x128xf32> -> vector<8x128xf32>
    %c0_3 = arith.constant 0 : index
    %c0_4 = arith.constant 0 : index
    %3 = vector.load %arg3[%c0_3, %c0_4] : memref<8x256xf32, #tpu.memory_space<vmem>>, vector<8x128xf32>
    tpu.vector_store %arg3[%c0_3, %c0_4], %2 {strides = array<i32>} : memref<8x256xf32, #tpu.memory_space<vmem>>, vector<8x128xf32>,
    %4 = vector.extract_strided_slice %2 {offsets = [0, 0], sizes = [8, 6], strides = [1, 1]} : vector<8x128xf32> to vector<8x6xf32>
    %cst_5 = arith.constant dense<0xFF800000> : vector<8xf32>
    %5 = vector.multi_reduction <maximumf>, %4, %cst_5 [1] : vector<8x6xf32> to vector<8xf32>
    %6 = vector.shape_cast %5 : vector<8xf32> to vector<8x1xf32>
    %7 = vector.extract_strided_slice %2 {offsets = [0, 6], sizes = [8, 12], strides = [1, 1]} : vector<8x128xf32> to vector<8x12xf32>
    %cst_6 = arith.constant dense<0xFF800000> : vector<8xf32>
    %8 = vector.multi_reduction <maximumf>, %7, %cst_6 [1] : vector<8x12xf32> to vector<8xf32>
    %9 = vector.shape_cast %8 : vector<8xf32> to vector<8x1xf32>
    %cst_7 = arith.constant 0.000000e+00 : f32
    %10 = vector.broadcast %cst_7 : f32 to vector<8x126xf32>
    %11 = tpu.concatenate %6, %9, %10 in 1 : vector<8x1xf32>, vector<8x1xf32>, vector<8x126xf32> -> vector<8x128xf32>
    %c0_8 = arith.constant 0 : index
    %c128 = arith.constant 128 : index
    %12 = vector.load %arg3[%c0_8, %c128] : memref<8x256xf32, #tpu.memory_space<vmem>>, vector<8x128xf32>
    tpu.vector_store %arg3[%c0_8, %c128], %11 {strides = array<i32>} : memref<8x256xf32, #tpu.memory_space<vmem>>, vector<8x128xf32>,
    return
  }
  func.func @transform_0(%arg0: i32) -> (i32, i32) {
    %c0_i32 = arith.constant 0 : i32
    %c0_i32_0 = arith.constant 0 : i32
    return %arg0, %c0_i32 : i32, i32
  }
  func.func @transform_1(%arg0: i32) -> (i32, i32) {
    %c0_i32 = arith.constant 0 : i32
    %c0_i32_0 = arith.constant 0 : i32
    %c0_i32_1 = arith.constant 0 : i32
    return %c0_i32, %c0_i32_0 : i32, i32
  }
  func.func @transform_2(%arg0: i32) -> (i32, i32) {
    %c0_i32 = arith.constant 0 : i32
    %c0_i32_0 = arith.constant 0 : i32
    return %arg0, %c0_i32 : i32, i32
  }
}

</mosaic_0001>

<llo_original>
// kernel: tpu_custom_call.1
$region0: #{tpu_custom_call.1}
  #allocation0 [shape = 'u32[]', space=smem, size = 0x4, offset = 0x4, fixed_abs, tag = 'smem constant byte address 0x4 - core index']
  #allocation1 [shape = 'u32[144,128]{1,0:T(1,128)}', space=vmem, size = 0x12000, scoped, tag = 'internal scratch']
  %s0 = inlined_call_operand.vmem [shape: f32[8,32], index: 0, kind: input, shape index: {}]
  %s1 = inlined_call_operand.vmem [shape: f32[128,32], index: 1, kind: input, shape index: {}]
  %s2 = inlined_call_operand.hbm [shape: f32[8,256], index: 2, kind: output, shape index: {}]
  %s3 = sld [smem:[#allocation0]]
  $region18: #{tpu_custom_call.1} parent=0
    _
  %s5 = ssub.s32 1, %s3
  %s6 = scalar_select 0, %s5, %s3
  $region1: #{tpu_custom_call.1} parent=0
    #allocation2 [shape = 'u8[8192]{0}', space=vmem, size = 0x2000, scoped, tag = 'output window, operand 0, single buffered']
    #allocation3 [shape = 's32[1]{0}', space=sflag, size = 0x4, scoped, tag = 'scoped memory for tpu_custom_call.1']
    %7 = vsyncpa [#allocation3], 0
    // Predicated region
    $region2: #{tpu_custom_call.1} parent=1 // pred_check
      _
    $region3: #{tpu_custom_call.1} parent=1 // pred_check_branch
      %9 = sbr.rel (0) target = $region5
    $region4: #{tpu_custom_call.1} parent=1 // pred_region
      _
    $region5: #{tpu_custom_call.1} parent=1 // pred_fallthru
      _
    // Predicated region
    $region6: #{tpu_custom_call.1} parent=1 // pred_check
      _
    $region7: #{tpu_custom_call.1} parent=1 // pred_check_branch
      %11 = sbr.rel (0) target = $region9
    $region8: #{tpu_custom_call.1} parent=1 // pred_region
      _
    $region9: #{tpu_custom_call.1} parent=1 // pred_fallthru
      _
    %v12 = vld [vmem:[%s0] sm:$0xff]
    %v13 = vld [vmem:[%s1] sm:$0xff]
    %v14 = vld [vmem:[%s1 + $0x8] sm:$0xff]
    %v15 = vld [vmem:[%s1 + $0x10] sm:$0xff]
    %v16 = vld [vmem:[%s1 + $0x18] sm:$0xff]
    %v17 = vld [vmem:[%s1 + $0x20] sm:$0xff]
    %v18 = vld [vmem:[%s1 + $0x28] sm:$0xff]
    %v19 = vld [vmem:[%s1 + $0x30] sm:$0xff]
    %v20 = vld [vmem:[%s1 + $0x38] sm:$0xff]
    %v21 = vld [vmem:[%s1 + $0x40] sm:$0xff]
    %v22 = vld [vmem:[%s1 + $0x48] sm:$0xff]
    %v23 = vld [vmem:[%s1 + $0x50] sm:$0xff]
    %v24 = vld [vmem:[%s1 + $0x58] sm:$0xff]
    %v25 = vld [vmem:[%s1 + $0x60] sm:$0xff]
    %v26 = vld [vmem:[%s1 + $0x68] sm:$0xff]
    %v27 = vld [vmem:[%s1 + $0x70] sm:$0xff]
    %v28 = vld [vmem:[%s1 + $0x78] sm:$0xff]
    %vm29 = vcmask 261120
    %v31 = vsel %vm29, %v12, 0
    %v34 = vsel %vm29, %v13, 0
    %v37 = vsel %vm29, %v14, 0
    %v40 = vsel %vm29, %v15, 0
    %v43 = vsel %vm29, %v16, 0
    %v46 = vsel %vm29, %v17, 0
    %v49 = vsel %vm29, %v18, 0
    %v52 = vsel %vm29, %v19, 0
    %v55 = vsel %vm29, %v20, 0
    %v58 = vsel %vm29, %v21, 0
    %v61 = vsel %vm29, %v22, 0
    %v64 = vsel %vm29, %v23, 0
    %v67 = vsel %vm29, %v24, 0
    %v70 = vsel %vm29, %v25, 0
    %v73 = vsel %vm29, %v26, 0
    %v76 = vsel %vm29, %v27, 0
    %v79 = vsel %vm29, %v28, 0
    %81 = vmatprep.subr.mxu0 0.0
    %82 = vmatpush1.xpose.msra.mxu0 %v79
    %83 = vmatprep.subr.mxu0 0.0
    %84 = vmatpush1.xpose.msra.mxu0 %v76
    %85 = vmatprep.subr.mxu0 0.0
    %86 = vmatpush1.xpose.msra.mxu0 %v73
    %87 = vmatprep.subr.mxu0 0.0
    %88 = vmatpush1.xpose.msra.mxu0 %v70
    %89 = vmatprep.subr.mxu0 0.0
    %90 = vmatpush1.xpose.msra.mxu0 %v67
    %91 = vmatprep.subr.mxu0 0.0
    %92 = vmatpush1.xpose.msra.mxu0 %v64
    %93 = vmatprep.subr.mxu0 0.0
    %94 = vmatpush1.xpose.msra.mxu0 %v61
    %95 = vmatprep.subr.mxu0 0.0
    %96 = vmatpush1.xpose.msra.mxu0 %v58
    %97 = vmatprep.subr.mxu0 0.0
    %98 = vmatpush1.xpose.msra.mxu0 %v55
    %99 = vmatprep.subr.mxu0 0.0
    %100 = vmatpush1.xpose.msra.mxu0 %v52
    %101 = vmatprep.subr.mxu0 0.0
    %102 = vmatpush1.xpose.msra.mxu0 %v49
    %103 = vmatprep.subr.mxu0 0.0
    %104 = vmatpush1.xpose.msra.mxu0 %v46
    %105 = vmatprep.subr.mxu0 0.0
    %106 = vmatpush1.xpose.msra.mxu0 %v43
    %107 = vmatprep.subr.mxu0 0.0
    %108 = vmatpush1.xpose.msra.mxu0 %v40
    %109 = vmatprep.subr.mxu0 0.0
    %110 = vmatpush1.xpose.msra.mxu0 %v37
    %111 = vmatprep.subr.mxu0 0.0
    %112 = vmatpush1.xpose.msra.mxu0 %v34
    %113 = vmatprep.subr.mxu0 0.0
    %114 = vmatpush2.xpose.msra.mxu0 0.0
    %115 = vmatprep.subr.mxu0 0.0
    %116 = vmatpush2.xpose.msra.mxu0 0.0
    %117 = vmatprep.subr.mxu0 0.0
    %118 = vmatpush2.xpose.msra.mxu0 0.0
    %119 = vmatprep.subr.mxu0 0.0
    %120 = vmatpush2.xpose.msra.mxu0 0.0
    %121 = vmatprep.subr.mxu0 0.0
    %122 = vmatpush2.xpose.msra.mxu0 0.0
    %123 = vmatprep.subr.mxu0 0.0
    %124 = vmatpush2.xpose.msra.mxu0 0.0
    %125 = vmatprep.subr.mxu0 0.0
    %126 = vmatpush2.xpose.msra.mxu0 0.0
    %127 = vmatprep.subr.mxu0 0.0
    %128 = vmatpush2.xpose.msra.mxu0 0.0
    %129 = vmatprep.subr.mxu0 0.0
    %130 = vmatpush2.xpose.msra.mxu0 0.0
    %131 = vmatprep.subr.mxu0 0.0
    %132 = vmatpush2.xpose.msra.mxu0 0.0
    %133 = vmatprep.subr.mxu0 0.0
    %134 = vmatpush2.xpose.msra.mxu0 0.0
    %135 = vmatprep.subr.mxu0 0.0
    %136 = vmatpush2.xpose.msra.mxu0 0.0
    %137 = vmatprep.subr.mxu0 0.0
    %138 = vmatpush2.xpose.msra.mxu0 0.0
    %139 = vmatprep.subr.mxu0 0.0
    %140 = vmatpush2.xpose.msra.mxu0 0.0
    %141 = vmatprep.subr.mxu0 0.0
    %142 = vmatpush2.xpose.msra.mxu0 0.0
    %143 = vmatprep.subr.mxu0 0.0
    %144 = vmatpush2.xpose.msra.mxu0 0.0
    %145 = vmatprep.mubr.f32.mxu0 0.0
    %146 = vmatmul.mubr.f32.gmra.mxu0 %v31
    %v147 = vpop.f32.mrf.mxu0
    %v148 = vadd.f32 0.0, %v147
    %v149 = vpop.f32.mrf.mxu0
    %150 = vdwg.mxu0
    %151 = vst [vmem:[#allocation2] sm:$0xff] %v148
    %vm152 = vcmask 48128
    %v153 = vsel %vm152, %v148, -inf
    %154 = vmax.xlane.f32.xlu0 %v153
    %v155 = vpop.xlane.xlu0 %154
    %vm156 = vcmask 146480
    %v157 = vsel %vm156, %v148, -inf
    %158 = vmax.xlane.f32.xlu0 %v157
    %v159 = vpop.xlane.xlu0 %158
    %vm160 = vcmask 7168
    %v161 = vsel %vm160, %v155, %v159
    %vm162 = vcmask 15360
    %v163 = vsel %vm162, %v161, 0.0
    %164 = vst [vmem:[#allocation2 + $0x8] sm:$0xff] %v163
    // Predicated region
    $region10: #{tpu_custom_call.1} parent=1 // pred_check
      _
    $region11: #{tpu_custom_call.1} parent=1 // pred_check_branch
      %166 = sbr.rel (0) target = $region13
    $region12: #{tpu_custom_call.1} parent=1 // pred_region
      %s168 = ssub.s32 256, 256
      %169 = vsyncadd [#allocation3], %s168
      %s171 = sshll.u32 [#allocation2], 4
      %s172 = int_to_ptr.vmem [resolvable:$true] %s171
      %174 = dma.vmem_to_hbm [thread:$0]  %s172, 256, %s2, [#allocation3]
    $region13: #{tpu_custom_call.1} parent=1 // pred_fallthru
      _
    // Predicated region
    $region14: #{tpu_custom_call.1} parent=1 // pred_check
      _
    $region15: #{tpu_custom_call.1} parent=1 // pred_check_branch
      %176 = sbr.rel (0) target = $region17
    $region16: #{tpu_custom_call.1} parent=1 // pred_region
      %177 = dma.done [#allocation3], 256
    $region17: #{tpu_custom_call.1} parent=1 // pred_fallthru
      _
    %178 = vsyncpa [#allocation3], 1

</llo_original>
